<compile_context>
chip_gen: v7x
topology: tpu7x:2x2x1
jax: 0.10.0
libtpu: 0.0.40
codegen_flags: <defaults>
</compile_context>

<pallas_src>
import jax
import jax.numpy as jnp
from jax.experimental import pallas as pl
from jax.experimental.pallas import tpu as pltpu

INPUTS = 7
UNITS = 32


def _round_up(n, m):
    return ((n + m - 1) // m) * m


def _mlp_kernel(x_ref,
                w0_ref, b0_ref,
                w1_ref, b1_ref,
                w2_ref, b2_ref,
                w3_ref, b3_ref,
                o_ref):
    """One batch tile, batch on the lane axis. Activations are (32, batch_tile)."""
    cdt = w0_ref.dtype  # matmul input dtype (f32 default; optionally bf16)

    h = jnp.dot(w0_ref[...], x_ref[...].astype(cdt),
                preferred_element_type=jnp.float32) + b0_ref[...]
    h = jnp.maximum(h, 0.0)

    h = jnp.dot(w1_ref[...], h.astype(cdt),
                preferred_element_type=jnp.float32) + b1_ref[...]
    h = jnp.maximum(h, 0.0)

    h = jnp.dot(w2_ref[...], h.astype(cdt),
                preferred_element_type=jnp.float32) + b2_ref[...]
    h = jnp.maximum(h, 0.0)

    # fc3 (32 -> 1): broadcast-multiply + sublane reduce (VPU/XLU) instead of an
    # almost-empty 1-wide MXU matmul.
    z = jnp.sum(w3_ref[...].astype(jnp.float32) * h,
                axis=0, keepdims=True) + b3_ref[...]          # (1, batch_tile)

    # sigmoid; the approximate reciprocal runs on the (otherwise idle) EUP slot.
    p = pl.reciprocal(1.0 + jnp.exp(-z), approx=True)
    o_ref[...] = p.astype(o_ref.dtype)


def _build_call(B_pad, batch_tile, single_buffer_weights):
    def const_spec(shape):
        if single_buffer_weights:
            # Constant index_map across the grid -> keep resident, single buffer.
            return pl.BlockSpec(shape, lambda i: (0, 0),
                                pipeline_mode=pl.Buffered(1))
        return pl.BlockSpec(shape, lambda i: (0, 0))

    in_specs = [
        pl.BlockSpec((INPUTS, batch_tile), lambda i: (0, i)),   # x tile (7, bt)
        const_spec((UNITS, INPUTS)), const_spec((UNITS, 1)),    # fc0
        const_spec((UNITS, UNITS)), const_spec((UNITS, 1)),     # fc1
        const_spec((UNITS, UNITS)), const_spec((UNITS, 1)),     # fc2
        const_spec((UNITS, 1)),     const_spec((1, 1)),         # fc3
    ]
    out_spec = pl.BlockSpec((1, batch_tile), lambda i: (0, i))  # lane-dense output

    return pl.pallas_call(
        _mlp_kernel,
        out_shape=jax.ShapeDtypeStruct((1, B_pad), jnp.float32),
        grid_spec=pltpu.PrefetchScalarGridSpec(
            num_scalar_prefetch=0,
            grid=(B_pad // batch_tile,),
            in_specs=in_specs,
            out_specs=out_spec,
        ),
        compiler_params=pltpu.CompilerParams(
            dimension_semantics=("parallel",),
        ),
    )


def net_forward(x, params, *, batch_tile=None, compute_dtype=jnp.float32):
    """Run the MLP with a Pallas kernel.

    x: (B, 7) float32. Returns (B, 1) float32 probabilities.
    """
    (w0, b0), (w1, b1), (w2, b2), (w3, b3) = params
    B = x.shape[0]

    if batch_tile is None:
        batch_tile = min(1024, _round_up(max(B, 1), 128))
    assert batch_tile % 128 == 0, "batch_tile must be a multiple of 128 (lane width)"

    B_pad = _round_up(B, batch_tile)
    x_pad = x.astype(compute_dtype)
    if B_pad != B:
        x_pad = jnp.pad(x_pad, ((0, B_pad - B), (0, 0)))
    x_t = x_pad.T  # (7, B_pad) -- batch on lanes

    args = (
        x_t,
        w0.astype(compute_dtype), b0.astype(jnp.float32),
        w1.astype(compute_dtype), b1.astype(jnp.float32),
        w2.astype(compute_dtype), b2.astype(jnp.float32),
        w3.astype(jnp.float32),   b3.astype(jnp.float32),
    )

    try:
        out_t = _build_call(B_pad, batch_tile, single_buffer_weights=True)(*args)
    except Exception:
        # Fallback if this JAX/Mosaic version rejects pipeline_mode=pl.Buffered(1).
        out_t = _build_call(B_pad, batch_tile, single_buffer_weights=False)(*args)

    return out_t[0, :B].reshape(B, 1)


def init_params(key):
    """nn.Linear-style init: U(-1/sqrt(fan_in), 1/sqrt(fan_in)).

    fc0..fc2 weights stored (out, in) with (out, 1) biases; fc3 stored as a
    (32, 1) column (for the in-kernel multiply + reduce) with a (1, 1) bias."""
    dims = [(INPUTS, UNITS), (UNITS, UNITS), (UNITS, UNITS), (UNITS, 1)]
    params = []
    for layer_idx, (fan_in, fan_out) in enumerate(dims):
        key, kw, kb = jax.random.split(key, 3)
        bound = fan_in ** -0.5
        if layer_idx < 3:
            w = jax.random.uniform(kw, (fan_out, fan_in), jnp.float32, -bound, bound)
            b = jax.random.uniform(kb, (fan_out, 1), jnp.float32, -bound, bound)
        else:
            w = jax.random.uniform(kw, (fan_in, 1), jnp.float32, -bound, bound)
            b = jax.random.uniform(kb, (1, 1), jnp.float32, -bound, bound)
        params.append((w, b))
    return params


def _reference_forward(x, params):
    (w0, b0), (w1, b1), (w2, b2), (w3, b3) = params
    h = jnp.maximum(x @ w0.T + b0.T, 0.0)
    h = jnp.maximum(h @ w1.T + b1.T, 0.0)
    h = jnp.maximum(h @ w2.T + b2.T, 0.0)
    z = h @ w3 + b3
    return jax.nn.sigmoid(z)


if __name__ == "__main__":
    key = jax.random.PRNGKey(0)
    key, kx_small, kx_big = jax.random.split(key, 3)
    params = init_params(key)

    # Tolerance is relaxed slightly because the kernel uses the EUP approximate
    # reciprocal for the sigmoid.
    TOL = 2e-3

    # 1) Tiny batch: exercises padding to the 128-lane tile.
    x_small = jax.random.normal(kx_small, (8, INPUTS), jnp.float32)
    out_small = jax.block_until_ready(net_forward(x_small, params))
    ref_small = _reference_forward(x_small, params)
    assert out_small.shape == (8, 1)
    assert jnp.allclose(out_small, ref_small, atol=TOL, rtol=TOL)

    # 2) Larger batch, 512-row tiles: 4-step grid -> pipelining + (on v7x)
    #    sharding of the parallel batch axis across both TensorCores.
    x_big = jax.random.normal(kx_big, (2048, INPUTS), jnp.float32)
    out_big = jax.block_until_ready(net_forward(x_big, params, batch_tile=512))
    ref_big = _reference_forward(x_big, params)
    assert out_big.shape == (2048, 1)
    assert jnp.allclose(out_big, ref_big, atol=TOL, rtol=TOL)

    print("KERNEL_OK")
</pallas_src>

<mosaic_0001>
module attributes {stable_mosaic.version = 11 : i64} {
  func.func @_mlp_kernel(%arg0: i32, %arg1: memref<7x128xf32, #tpu.memory_space<vmem>>, %arg2: memref<32x7xf32, #tpu.memory_space<vmem>>, %arg3: memref<32x1xf32, #tpu.memory_space<vmem>>, %arg4: memref<32x32xf32, #tpu.memory_space<vmem>>, %arg5: memref<32x1xf32, #tpu.memory_space<vmem>>, %arg6: memref<32x32xf32, #tpu.memory_space<vmem>>, %arg7: memref<32x1xf32, #tpu.memory_space<vmem>>, %arg8: memref<32x1xf32, #tpu.memory_space<vmem>>, %arg9: memref<1x1xf32, #tpu.memory_space<vmem>>, %arg10: memref<1x128xf32, #tpu.memory_space<vmem>>) attributes {dimension_semantics = [#tpu.dimension_semantics<parallel>], iteration_bounds = array<i64: 1>, scalar_prefetch = 0 : i64, scratch_operands = 0 : i64, tpu.core_type = #tpu.core_type<tc>, window_params = [{transform_indices = @transform_0, window_bounds = array<i64: 7, 128>}, {pipeline_mode = #tpu.pipeline_mode<synchronous>, transform_indices = @transform_1, window_bounds = array<i64: 32, 7>}, {pipeline_mode = #tpu.pipeline_mode<synchronous>, transform_indices = @transform_2, window_bounds = array<i64: 32, 1>}, {pipeline_mode = #tpu.pipeline_mode<synchronous>, transform_indices = @transform_3, window_bounds = array<i64: 32, 32>}, {pipeline_mode = #tpu.pipeline_mode<synchronous>, transform_indices = @transform_4, window_bounds = array<i64: 32, 1>}, {pipeline_mode = #tpu.pipeline_mode<synchronous>, transform_indices = @transform_5, window_bounds = array<i64: 32, 32>}, {pipeline_mode = #tpu.pipeline_mode<synchronous>, transform_indices = @transform_6, window_bounds = array<i64: 32, 1>}, {pipeline_mode = #tpu.pipeline_mode<synchronous>, transform_indices = @transform_7, window_bounds = array<i64: 32, 1>}, {pipeline_mode = #tpu.pipeline_mode<synchronous>, transform_indices = @transform_8, window_bounds = array<i64: 1, 1>}, {transform_indices = @transform_9, window_bounds = array<i64: 1, 128>}]} {
    %c0 = arith.constant 0 : index
    %c0_0 = arith.constant 0 : index
    %0 = vector.load %arg2[%c0, %c0_0] : memref<32x7xf32, #tpu.memory_space<vmem>>, vector<32x7xf32>
    %c0_1 = arith.constant 0 : index
    %c0_2 = arith.constant 0 : index
    %1 = vector.load %arg1[%c0_1, %c0_2] : memref<7x128xf32, #tpu.memory_space<vmem>>, vector<7x128xf32>
    %cst = arith.constant dense<0.000000e+00> : vector<32x128xf32>
    %2 = tpu.matmul %0, %1, %cst {dimension_numbers = #tpu.dot_dimension_numbers<[1], [0], [0], [1], [0, 0, 1, 1], [], []>} : vector<32x7xf32>, vector<7x128xf32>, vector<32x128xf32> -> vector<32x128xf32>
    %c0_3 = arith.constant 0 : index
    %c0_4 = arith.constant 0 : index
    %3 = vector.load %arg3[%c0_3, %c0_4] : memref<32x1xf32, #tpu.memory_space<vmem>>, vector<32x1xf32>
    %4 = vector.broadcast %3 : vector<32x1xf32> to vector<32x128xf32>
    %5 = arith.addf %2, %4 : vector<32x128xf32>
    %cst_5 = arith.constant 0.000000e+00 : f32
    %6 = vector.broadcast %cst_5 : f32 to vector<32x128xf32>
    %7 = arith.maximumf %5, %6 : vector<32x128xf32>
    %c0_6 = arith.constant 0 : index
    %c0_7 = arith.constant 0 : index
    %8 = vector.load %arg4[%c0_6, %c0_7] : memref<32x32xf32, #tpu.memory_space<vmem>>, vector<32x32xf32>
    %cst_8 = arith.constant dense<0.000000e+00> : vector<32x128xf32>
    %9 = tpu.matmul %8, %7, %cst_8 {dimension_numbers = #tpu.dot_dimension_numbers<[1], [0], [0], [1], [0, 0, 1, 1], [], []>} : vector<32x32xf32>, vector<32x128xf32>, vector<32x128xf32> -> vector<32x128xf32>
    %c0_9 = arith.constant 0 : index
    %c0_10 = arith.constant 0 : index
    %10 = vector.load %arg5[%c0_9, %c0_10] : memref<32x1xf32, #tpu.memory_space<vmem>>, vector<32x1xf32>
    %11 = vector.broadcast %10 : vector<32x1xf32> to vector<32x128xf32>
    %12 = arith.addf %9, %11 : vector<32x128xf32>
    %cst_11 = arith.constant 0.000000e+00 : f32
    %13 = vector.broadcast %cst_11 : f32 to vector<32x128xf32>
    %14 = arith.maximumf %12, %13 : vector<32x128xf32>
    %c0_12 = arith.constant 0 : index
    %c0_13 = arith.constant 0 : index
    %15 = vector.load %arg6[%c0_12, %c0_13] : memref<32x32xf32, #tpu.memory_space<vmem>>, vector<32x32xf32>
    %cst_14 = arith.constant dense<0.000000e+00> : vector<32x128xf32>
    %16 = tpu.matmul %15, %14, %cst_14 {dimension_numbers = #tpu.dot_dimension_numbers<[1], [0], [0], [1], [0, 0, 1, 1], [], []>} : vector<32x32xf32>, vector<32x128xf32>, vector<32x128xf32> -> vector<32x128xf32>
    %c0_15 = arith.constant 0 : index
    %c0_16 = arith.constant 0 : index
    %17 = vector.load %arg7[%c0_15, %c0_16] : memref<32x1xf32, #tpu.memory_space<vmem>>, vector<32x1xf32>
    %18 = vector.broadcast %17 : vector<32x1xf32> to vector<32x128xf32>
    %19 = arith.addf %16, %18 : vector<32x128xf32>
    %cst_17 = arith.constant 0.000000e+00 : f32
    %20 = vector.broadcast %cst_17 : f32 to vector<32x128xf32>
    %21 = arith.maximumf %19, %20 : vector<32x128xf32>
    %c0_18 = arith.constant 0 : index
    %c0_19 = arith.constant 0 : index
    %22 = vector.load %arg8[%c0_18, %c0_19] : memref<32x1xf32, #tpu.memory_space<vmem>>, vector<32x1xf32>
    %23 = vector.broadcast %22 : vector<32x1xf32> to vector<32x128xf32>
    %24 = arith.mulf %23, %21 : vector<32x128xf32>
    %cst_20 = arith.constant dense<0.000000e+00> : vector<128xf32>
    %25 = vector.multi_reduction <add>, %24, %cst_20 [0] : vector<32x128xf32> to vector<128xf32>
    %26 = vector.shape_cast %25 : vector<128xf32> to vector<1x128xf32>
    %c0_21 = arith.constant 0 : index
    %c0_22 = arith.constant 0 : index
    %27 = vector.load %arg9[%c0_21, %c0_22] : memref<1x1xf32, #tpu.memory_space<vmem>>, vector<1x1xf32>
    %28 = vector.broadcast %27 : vector<1x1xf32> to vector<1x128xf32>
    %29 = arith.addf %26, %28 : vector<1x128xf32>
    %cst_23 = arith.constant 0.000000e+00 : f32
    %30 = vector.broadcast %cst_23 : f32 to vector<1x128xf32>
    %31 = arith.subf %30, %29 : vector<1x128xf32>
    %32 = math.exp %31 : vector<1x128xf32>
    %cst_24 = arith.constant 1.000000e+00 : f32
    %33 = vector.broadcast %cst_24 : f32 to vector<1x128xf32>
    %34 = arith.addf %33, %32 : vector<1x128xf32>
    %35 = tpu.reciprocal %34 {approx = true} : vector<1x128xf32> -> vector<1x128xf32>
    %c0_25 = arith.constant 0 : index
    %c0_26 = arith.constant 0 : index
    %36 = vector.load %arg10[%c0_25, %c0_26] : memref<1x128xf32, #tpu.memory_space<vmem>>, vector<1x128xf32>
    tpu.vector_store %arg10[%c0_25, %c0_26], %35 {strides = array<i32>} : memref<1x128xf32, #tpu.memory_space<vmem>>, vector<1x128xf32>,
    return
  }
  func.func @transform_0(%arg0: i32) -> (i32, i32) {
    %c0_i32 = arith.constant 0 : i32
    %c0_i32_0 = arith.constant 0 : i32
    return %c0_i32, %arg0 : i32, i32
  }
  func.func @transform_1(%arg0: i32) -> (i32, i32) {
    %c0_i32 = arith.constant 0 : i32
    %c0_i32_0 = arith.constant 0 : i32
    %c0_i32_1 = arith.constant 0 : i32
    return %c0_i32, %c0_i32_0 : i32, i32
  }
  func.func @transform_2(%arg0: i32) -> (i32, i32) {
    %c0_i32 = arith.constant 0 : i32
    %c0_i32_0 = arith.constant 0 : i32
    %c0_i32_1 = arith.constant 0 : i32
    return %c0_i32, %c0_i32_0 : i32, i32
  }
  func.func @transform_3(%arg0: i32) -> (i32, i32) {
    %c0_i32 = arith.constant 0 : i32
    %c0_i32_0 = arith.constant 0 : i32
    %c0_i32_1 = arith.constant 0 : i32
    return %c0_i32, %c0_i32_0 : i32, i32
  }
  func.func @transform_4(%arg0: i32) -> (i32, i32) {
    %c0_i32 = arith.constant 0 : i32
    %c0_i32_0 = arith.constant 0 : i32
    %c0_i32_1 = arith.constant 0 : i32
    return %c0_i32, %c0_i32_0 : i32, i32
  }
  func.func @transform_5(%arg0: i32) -> (i32, i32) {
    %c0_i32 = arith.constant 0 : i32
    %c0_i32_0 = arith.constant 0 : i32
    %c0_i32_1 = arith.constant 0 : i32
    return %c0_i32, %c0_i32_0 : i32, i32
  }
  func.func @transform_6(%arg0: i32) -> (i32, i32) {
    %c0_i32 = arith.constant 0 : i32
    %c0_i32_0 = arith.constant 0 : i32
    %c0_i32_1 = arith.constant 0 : i32
    return %c0_i32, %c0_i32_0 : i32, i32
  }
  func.func @transform_7(%arg0: i32) -> (i32, i32) {
    %c0_i32 = arith.constant 0 : i32
    %c0_i32_0 = arith.constant 0 : i32
    %c0_i32_1 = arith.constant 0 : i32
    return %c0_i32, %c0_i32_0 : i32, i32
  }
  func.func @transform_8(%arg0: i32) -> (i32, i32) {
    %c0_i32 = arith.constant 0 : i32
    %c0_i32_0 = arith.constant 0 : i32
    %c0_i32_1 = arith.constant 0 : i32
    return %c0_i32, %c0_i32_0 : i32, i32
  }
  func.func @transform_9(%arg0: i32) -> (i32, i32) {
    %c0_i32 = arith.constant 0 : i32
    %c0_i32_0 = arith.constant 0 : i32
    return %c0_i32, %arg0 : i32, i32
  }
}

module attributes {stable_mosaic.version = 11 : i64} {
  func.func @_mlp_kernel(%arg0: i32, %arg1: memref<7x128xf32, #tpu.memory_space<vmem>>, %arg2: memref<32x7xf32, #tpu.memory_space<vmem>>, %arg3: memref<32x1xf32, #tpu.memory_space<vmem>>, %arg4: memref<32x32xf32, #tpu.memory_space<vmem>>, %arg5: memref<32x1xf32, #tpu.memory_space<vmem>>, %arg6: memref<32x32xf32, #tpu.memory_space<vmem>>, %arg7: memref<32x1xf32, #tpu.memory_space<vmem>>, %arg8: memref<32x1xf32, #tpu.memory_space<vmem>>, %arg9: memref<1x1xf32, #tpu.memory_space<vmem>>, %arg10: memref<1x128xf32, #tpu.memory_space<vmem>>) attributes {dimension_semantics = [#tpu.dimension_semantics<parallel>], iteration_bounds = array<i64: 1>, scalar_prefetch = 0 : i64, scratch_operands = 0 : i64, tpu.core_type = #tpu.core_type<tc>, window_params = [{transform_indices = @transform_0, window_bounds = array<i64: 7, 128>}, {pipeline_mode = #tpu.pipeline_mode<synchronous>, transform_indices = @transform_1, window_bounds = array<i64: 32, 7>}, {pipeline_mode = #tpu.pipeline_mode<synchronous>, transform_indices = @transform_2, window_bounds = array<i64: 32, 1>}, {pipeline_mode = #tpu.pipeline_mode<synchronous>, transform_indices = @transform_3, window_bounds = array<i64: 32, 32>}, {pipeline_mode = #tpu.pipeline_mode<synchronous>, transform_indices = @transform_4, window_bounds = array<i64: 32, 1>}, {pipeline_mode = #tpu.pipeline_mode<synchronous>, transform_indices = @transform_5, window_bounds = array<i64: 32, 32>}, {pipeline_mode = #tpu.pipeline_mode<synchronous>, transform_indices = @transform_6, window_bounds = array<i64: 32, 1>}, {pipeline_mode = #tpu.pipeline_mode<synchronous>, transform_indices = @transform_7, window_bounds = array<i64: 32, 1>}, {pipeline_mode = #tpu.pipeline_mode<synchronous>, transform_indices = @transform_8, window_bounds = array<i64: 1, 1>}, {transform_indices = @transform_9, window_bounds = array<i64: 1, 128>}]} {
    %c0 = arith.constant 0 : index
    %c0_0 = arith.constant 0 : index
    %0 = vector.load %arg2[%c0, %c0_0] : memref<32x7xf32, #tpu.memory_space<vmem>>, vector<32x7xf32>
    %c0_1 = arith.constant 0 : index
    %c0_2 = arith.constant 0 : index
    %1 = vector.load %arg1[%c0_1, %c0_2] : memref<7x128xf32, #tpu.memory_space<vmem>>, vector<7x128xf32>
    %cst = arith.constant dense<0.000000e+00> : vector<32x128xf32>
    %2 = tpu.matmul %0, %1, %cst {dimension_numbers = #tpu.dot_dimension_numbers<[1], [0], [0], [1], [0, 0, 1, 1], [], []>} : vector<32x7xf32>, vector<7x128xf32>, vector<32x128xf32> -> vector<32x128xf32>
    %c0_3 = arith.constant 0 : index
    %c0_4 = arith.constant 0 : index
    %3 = vector.load %arg3[%c0_3, %c0_4] : memref<32x1xf32, #tpu.memory_space<vmem>>, vector<32x1xf32>
    %4 = vector.broadcast %3 : vector<32x1xf32> to vector<32x128xf32>
    %5 = arith.addf %2, %4 : vector<32x128xf32>
    %cst_5 = arith.constant 0.000000e+00 : f32
    %6 = vector.broadcast %cst_5 : f32 to vector<32x128xf32>
    %7 = arith.maximumf %5, %6 : vector<32x128xf32>
    %c0_6 = arith.constant 0 : index
    %c0_7 = arith.constant 0 : index
    %8 = vector.load %arg4[%c0_6, %c0_7] : memref<32x32xf32, #tpu.memory_space<vmem>>, vector<32x32xf32>
    %cst_8 = arith.constant dense<0.000000e+00> : vector<32x128xf32>
    %9 = tpu.matmul %8, %7, %cst_8 {dimension_numbers = #tpu.dot_dimension_numbers<[1], [0], [0], [1], [0, 0, 1, 1], [], []>} : vector<32x32xf32>, vector<32x128xf32>, vector<32x128xf32> -> vector<32x128xf32>
    %c0_9 = arith.constant 0 : index
    %c0_10 = arith.constant 0 : index
    %10 = vector.load %arg5[%c0_9, %c0_10] : memref<32x1xf32, #tpu.memory_space<vmem>>, vector<32x1xf32>
    %11 = vector.broadcast %10 : vector<32x1xf32> to vector<32x128xf32>
    %12 = arith.addf %9, %11 : vector<32x128xf32>
    %cst_11 = arith.constant 0.000000e+00 : f32
    %13 = vector.broadcast %cst_11 : f32 to vector<32x128xf32>
    %14 = arith.maximumf %12, %13 : vector<32x128xf32>
    %c0_12 = arith.constant 0 : index
    %c0_13 = arith.constant 0 : index
    %15 = vector.load %arg6[%c0_12, %c0_13] : memref<32x32xf32, #tpu.memory_space<vmem>>, vector<32x32xf32>
    %cst_14 = arith.constant dense<0.000000e+00> : vector<32x128xf32>
    %16 = tpu.matmul %15, %14, %cst_14 {dimension_numbers = #tpu.dot_dimension_numbers<[1], [0], [0], [1], [0, 0, 1, 1], [], []>} : vector<32x32xf32>, vector<32x128xf32>, vector<32x128xf32> -> vector<32x128xf32>
    %c0_15 = arith.constant 0 : index
    %c0_16 = arith.constant 0 : index
    %17 = vector.load %arg7[%c0_15, %c0_16] : memref<32x1xf32, #tpu.memory_space<vmem>>, vector<32x1xf32>
    %18 = vector.broadcast %17 : vector<32x1xf32> to vector<32x128xf32>
    %19 = arith.addf %16, %18 : vector<32x128xf32>
    %cst_17 = arith.constant 0.000000e+00 : f32
    %20 = vector.broadcast %cst_17 : f32 to vector<32x128xf32>
    %21 = arith.maximumf %19, %20 : vector<32x128xf32>
    %c0_18 = arith.constant 0 : index
    %c0_19 = arith.constant 0 : index
    %22 = vector.load %arg8[%c0_18, %c0_19] : memref<32x1xf32, #tpu.memory_space<vmem>>, vector<32x1xf32>
    %23 = vector.broadcast %22 : vector<32x1xf32> to vector<32x128xf32>
    %24 = arith.mulf %23, %21 : vector<32x128xf32>
    %cst_20 = arith.constant dense<0.000000e+00> : vector<128xf32>
    %25 = vector.multi_reduction <add>, %24, %cst_20 [0] : vector<32x128xf32> to vector<128xf32>
    %26 = vector.shape_cast %25 : vector<128xf32> to vector<1x128xf32>
    %c0_21 = arith.constant 0 : index
    %c0_22 = arith.constant 0 : index
    %27 = vector.load %arg9[%c0_21, %c0_22] : memref<1x1xf32, #tpu.memory_space<vmem>>, vector<1x1xf32>
    %28 = vector.broadcast %27 : vector<1x1xf32> to vector<1x128xf32>
    %29 = arith.addf %26, %28 : vector<1x128xf32>
    %cst_23 = arith.constant 0.000000e+00 : f32
    %30 = vector.broadcast %cst_23 : f32 to vector<1x128xf32>
    %31 = arith.subf %30, %29 : vector<1x128xf32>
    %32 = math.exp %31 : vector<1x128xf32>
    %cst_24 = arith.constant 1.000000e+00 : f32
    %33 = vector.broadcast %cst_24 : f32 to vector<1x128xf32>
    %34 = arith.addf %33, %32 : vector<1x128xf32>
    %35 = tpu.reciprocal %34 {approx = true} : vector<1x128xf32> -> vector<1x128xf32>
    %c0_25 = arith.constant 0 : index
    %c0_26 = arith.constant 0 : index
    %36 = vector.load %arg10[%c0_25, %c0_26] : memref<1x128xf32, #tpu.memory_space<vmem>>, vector<1x128xf32>
    tpu.vector_store %arg10[%c0_25, %c0_26], %35 {strides = array<i32>} : memref<1x128xf32, #tpu.memory_space<vmem>>, vector<1x128xf32>,
    return
  }
  func.func @transform_0(%arg0: i32) -> (i32, i32) {
    %c0_i32 = arith.constant 0 : i32
    %c0_i32_0 = arith.constant 0 : i32
    return %c0_i32, %arg0 : i32, i32
  }
  func.func @transform_1(%arg0: i32) -> (i32, i32) {
    %c0_i32 = arith.constant 0 : i32
    %c0_i32_0 = arith.constant 0 : i32
    %c0_i32_1 = arith.constant 0 : i32
    return %c0_i32, %c0_i32_0 : i32, i32
  }
  func.func @transform_2(%arg0: i32) -> (i32, i32) {
    %c0_i32 = arith.constant 0 : i32
    %c0_i32_0 = arith.constant 0 : i32
    %c0_i32_1 = arith.constant 0 : i32
    return %c0_i32, %c0_i32_0 : i32, i32
  }
  func.func @transform_3(%arg0: i32) -> (i32, i32) {
    %c0_i32 = arith.constant 0 : i32
    %c0_i32_0 = arith.constant 0 : i32
    %c0_i32_1 = arith.constant 0 : i32
    return %c0_i32, %c0_i32_0 : i32, i32
  }
  func.func @transform_4(%arg0: i32) -> (i32, i32) {
    %c0_i32 = arith.constant 0 : i32
    %c0_i32_0 = arith.constant 0 : i32
    %c0_i32_1 = arith.constant 0 : i32
    return %c0_i32, %c0_i32_0 : i32, i32
  }
  func.func @transform_5(%arg0: i32) -> (i32, i32) {
    %c0_i32 = arith.constant 0 : i32
    %c0_i32_0 = arith.constant 0 : i32
    %c0_i32_1 = arith.constant 0 : i32
    return %c0_i32, %c0_i32_0 : i32, i32
  }
  func.func @transform_6(%arg0: i32) -> (i32, i32) {
    %c0_i32 = arith.constant 0 : i32
    %c0_i32_0 = arith.constant 0 : i32
    %c0_i32_1 = arith.constant 0 : i32
    return %c0_i32, %c0_i32_0 : i32, i32
  }
  func.func @transform_7(%arg0: i32) -> (i32, i32) {
    %c0_i32 = arith.constant 0 : i32
    %c0_i32_0 = arith.constant 0 : i32
    %c0_i32_1 = arith.constant 0 : i32
    return %c0_i32, %c0_i32_0 : i32, i32
  }
  func.func @transform_8(%arg0: i32) -> (i32, i32) {
    %c0_i32 = arith.constant 0 : i32
    %c0_i32_0 = arith.constant 0 : i32
    %c0_i32_1 = arith.constant 0 : i32
    return %c0_i32, %c0_i32_0 : i32, i32
  }
  func.func @transform_9(%arg0: i32) -> (i32, i32) {
    %c0_i32 = arith.constant 0 : i32
    %c0_i32_0 = arith.constant 0 : i32
    return %c0_i32, %arg0 : i32, i32
  }
}

</mosaic_0001>

<llo_original>
// kernel: tpu_custom_call.1
$region0: #{tpu_custom_call.1}
  #allocation0 [shape = 'u32[]', space=smem, size = 0x4, offset = 0x4, fixed_abs, tag = 'smem constant byte address 0x4 - core index']
  #allocation1 [shape = 'u32[144,128]{1,0:T(1,128)}', space=vmem, size = 0x12000, scoped, tag = 'internal scratch']
  #allocation2 [shape = 'f32[1,1]{1,0:T(1,128)S(1)}', space=vmem, size = 0x200, scoped, tag = 'scoped memory for tpu_custom_call.1']
  %s0 = inlined_call_operand.vmem [shape: f32[7,128], index: 0, kind: input, shape index: {}]
  %s1 = inlined_call_operand.vmem [shape: f32[32,7], index: 1, kind: input, shape index: {}]
  %s2 = inlined_call_operand.vmem [shape: f32[32,1], index: 2, kind: input, shape index: {}]
  %s3 = inlined_call_operand.vmem [shape: f32[32,32], index: 3, kind: input, shape index: {}]
  %s4 = inlined_call_operand.vmem [shape: f32[32,1], index: 4, kind: input, shape index: {}]
  %s5 = inlined_call_operand.vmem [shape: f32[32,32], index: 5, kind: input, shape index: {}]
  %s6 = inlined_call_operand.vmem [shape: f32[32,1], index: 6, kind: input, shape index: {}]
  %s7 = inlined_call_operand.vmem [shape: f32[32,1], index: 7, kind: input, shape index: {}]
  %s8 = inlined_call_operand.<no memory space> [shape: f32[1,1], index: 8, kind: input, shape index: {}]
  %s9 = inlined_call_operand.hbm [shape: f32[1,128], index: 9, kind: output, shape index: {}]
  %s10 = sld [smem:[#allocation0]]
  $region46: #{tpu_custom_call.1} parent=0
    _
  %s12 = ssub.s32 1, %s10
  %s13 = scalar_select 0, %s12, %s10
  %v14 = vstv %s8
  %15 = vst [vmem:[#allocation2] sm:$0x1] %v14
  $region1: #{tpu_custom_call.1} parent=0
    #allocation3 [shape = 'u8[512]{0}', space=vmem, size = 0x400, scoped, tag = 'output window, operand 0, single buffered']
    #allocation4 [shape = 's32[1]{0}', space=sflag, size = 0x4, scoped, tag = 'scoped memory for tpu_custom_call.1']
    %16 = vsyncpa [#allocation4], 0
    // Predicated region
    $region2: #{tpu_custom_call.1} parent=1 // pred_check
      _
    $region3: #{tpu_custom_call.1} parent=1 // pred_check_branch
      %18 = sbr.rel (0) target = $region5
    $region4: #{tpu_custom_call.1} parent=1 // pred_region
      _
    $region5: #{tpu_custom_call.1} parent=1 // pred_fallthru
      _
    // Predicated region
    $region6: #{tpu_custom_call.1} parent=1 // pred_check
      _
    $region7: #{tpu_custom_call.1} parent=1 // pred_check_branch
      %20 = sbr.rel (0) target = $region9
    $region8: #{tpu_custom_call.1} parent=1 // pred_region
      _
    $region9: #{tpu_custom_call.1} parent=1 // pred_fallthru
      _
    // Predicated region
    $region10: #{tpu_custom_call.1} parent=1 // pred_check
      _
    $region11: #{tpu_custom_call.1} parent=1 // pred_check_branch
      %22 = sbr.rel (0) target = $region13
    $region12: #{tpu_custom_call.1} parent=1 // pred_region
      _
    $region13: #{tpu_custom_call.1} parent=1 // pred_fallthru
      _
    // Predicated region
    $region14: #{tpu_custom_call.1} parent=1 // pred_check
      _
    $region15: #{tpu_custom_call.1} parent=1 // pred_check_branch
      %24 = sbr.rel (0) target = $region17
    $region16: #{tpu_custom_call.1} parent=1 // pred_region
      _
    $region17: #{tpu_custom_call.1} parent=1 // pred_fallthru
      _
    // Predicated region
    $region18: #{tpu_custom_call.1} parent=1 // pred_check
      _
    $region19: #{tpu_custom_call.1} parent=1 // pred_check_branch
      %26 = sbr.rel (0) target = $region21
    $region20: #{tpu_custom_call.1} parent=1 // pred_region
      _
    $region21: #{tpu_custom_call.1} parent=1 // pred_fallthru
      _
    // Predicated region
    $region22: #{tpu_custom_call.1} parent=1 // pred_check
      _
    $region23: #{tpu_custom_call.1} parent=1 // pred_check_branch
      %28 = sbr.rel (0) target = $region25
    $region24: #{tpu_custom_call.1} parent=1 // pred_region
      _
    $region25: #{tpu_custom_call.1} parent=1 // pred_fallthru
      _
    // Predicated region
    $region26: #{tpu_custom_call.1} parent=1 // pred_check
      _
    $region27: #{tpu_custom_call.1} parent=1 // pred_check_branch
      %30 = sbr.rel (0) target = $region29
    $region28: #{tpu_custom_call.1} parent=1 // pred_region
      _
    $region29: #{tpu_custom_call.1} parent=1 // pred_fallthru
      _
    // Predicated region
    $region30: #{tpu_custom_call.1} parent=1 // pred_check
      _
    $region31: #{tpu_custom_call.1} parent=1 // pred_check_branch
      %32 = sbr.rel (0) target = $region33
    $region32: #{tpu_custom_call.1} parent=1 // pred_region
      _
    $region33: #{tpu_custom_call.1} parent=1 // pred_fallthru
      _
    // Predicated region
    $region34: #{tpu_custom_call.1} parent=1 // pred_check
      _
    $region35: #{tpu_custom_call.1} parent=1 // pred_check_branch
      %34 = sbr.rel (0) target = $region37
    $region36: #{tpu_custom_call.1} parent=1 // pred_region
      _
    $region37: #{tpu_custom_call.1} parent=1 // pred_fallthru
      _
    %v35 = vld [vmem:[%s1] sm:$0xff]
    %v36 = vld [vmem:[%s1 + $0x8] sm:$0xff]
    %v37 = vld [vmem:[%s1 + $0x10] sm:$0xff]
    %v38 = vld [vmem:[%s1 + $0x18] sm:$0xff]
    %v39 = vld [vmem:[%s0] sm:$0x7f]
    %v40 = vld [vmem:[%s2] sm:$0xff]
    %v41 = vld [vmem:[%s2 + $0x8] sm:$0xff]
    %v42 = vld [vmem:[%s2 + $0x10] sm:$0xff]
    %v43 = vld [vmem:[%s2 + $0x18] sm:$0xff]
    %45 = vset.pattern.permute.xlu0 0
    %46 = vperm.xlu0 %45, %v40
    %v47 = vpop.permute.xlu0 %46
    %50 = vset.pattern.permute.xlu0 0
    %51 = vperm.xlu0 %50, %v41
    %v52 = vpop.permute.xlu0 %51
    %55 = vset.pattern.permute.xlu0 0
    %56 = vperm.xlu0 %55, %v42
    %v57 = vpop.permute.xlu0 %56
    %60 = vset.pattern.permute.xlu0 0
    %61 = vperm.xlu0 %60, %v43
    %v62 = vpop.permute.xlu0 %61
    %vm64 = vcmask 56320
    %v66 = vsel %vm64, %v35, 0
    %v69 = vsel %vm64, %v36, 0
    %v72 = vsel %vm64, %v37, 0
    %v75 = vsel %vm64, %v38, 0
    %vm77 = vcmask 1046528
    %v79 = vsel %vm77, %v39, 0
    %81 = vmatprep.subr.mxu0 0.0
    %82 = vmatpush1.msra.mxu0 %v79
    %83 = vmatprep.subr.mxu0 0.0
    %84 = vmatpush1.msra.mxu0 0.0
    %85 = vmatprep.subr.mxu0 0.0
    %86 = vmatpush1.msra.mxu0 0.0
    %87 = vmatprep.subr.mxu0 0.0
    %88 = vmatpush1.msra.mxu0 0.0
    %89 = vmatprep.subr.mxu0 0.0
    %90 = vmatpush1.msra.mxu0 0.0
    %91 = vmatprep.subr.mxu0 0.0
    %92 = vmatpush1.msra.mxu0 0.0
    %93 = vmatprep.subr.mxu0 0.0
    %94 = vmatpush1.msra.mxu0 0.0
    %95 = vmatprep.subr.mxu0 0.0
    %96 = vmatpush1.msra.mxu0 0.0
    %97 = vmatprep.subr.mxu0 0.0
    %98 = vmatpush1.msra.mxu0 0.0
    %99 = vmatprep.subr.mxu0 0.0
    %100 = vmatpush1.msra.mxu0 0.0
    %101 = vmatprep.subr.mxu0 0.0
    %102 = vmatpush1.msra.mxu0 0.0
    %103 = vmatprep.subr.mxu0 0.0
    %104 = vmatpush1.msra.mxu0 0.0
    %105 = vmatprep.subr.mxu0 0.0
    %106 = vmatpush1.msra.mxu0 0.0
    %107 = vmatprep.subr.mxu0 0.0
    %108 = vmatpush1.msra.mxu0 0.0
    %109 = vmatprep.subr.mxu0 0.0
    %110 = vmatpush1.msra.mxu0 0.0
    %111 = vmatprep.subr.mxu0 0.0
    %112 = vmatpush1.msra.mxu0 0.0
    %113 = vmatprep.subr.mxu0 0.0
    %114 = vmatpush1.msra.mxu0 0.0
    %115 = vmatprep.subr.mxu0 0.0
    %116 = vmatpush1.msra.mxu0 0.0
    %117 = vmatprep.subr.mxu0 0.0
    %118 = vmatpush1.msra.mxu0 0.0
    %119 = vmatprep.subr.mxu0 0.0
    %120 = vmatpush1.msra.mxu0 0.0
    %121 = vmatprep.subr.mxu0 0.0
    %122 = vmatpush1.msra.mxu0 0.0
    %123 = vmatprep.subr.mxu0 0.0
    %124 = vmatpush1.msra.mxu0 0.0
    %125 = vmatprep.subr.mxu0 0.0
    %126 = vmatpush1.msra.mxu0 0.0
    %127 = vmatprep.subr.mxu0 0.0
    %128 = vmatpush1.msra.mxu0 0.0
    %129 = vmatprep.subr.mxu0 0.0
    %130 = vmatpush1.msra.mxu0 0.0
    %131 = vmatprep.subr.mxu0 0.0
    %132 = vmatpush1.msra.mxu0 0.0
    %133 = vmatprep.subr.mxu0 0.0
    %134 = vmatpush1.msra.mxu0 0.0
    %135 = vmatprep.subr.mxu0 0.0
    %136 = vmatpush1.msra.mxu0 0.0
    %137 = vmatprep.subr.mxu0 0.0
    %138 = vmatpush1.msra.mxu0 0.0
    %139 = vmatprep.subr.mxu0 0.0
    %140 = vmatpush1.msra.mxu0 0.0
    %141 = vmatprep.subr.mxu0 0.0
    %142 = vmatpush1.msra.mxu0 0.0
    %143 = vmatprep.subr.mxu0 0.0
    %144 = vmatpush1.msra.mxu0 0.0
    %145 = vmatprep.mubr.f32.mxu0 0.0
    %146 = vmatmul.mubr.f32.gmra.mrb[0].mxu0 %v66
    %v147 = vpop.f32.mrb[0].mxu0
    %v148 = vadd.f32 %v47, %v147
    %v149 = vpop.f32.mrb[0].mxu0
    %150 = vmatprep.mubr.f32.mxu0 0.0
    %151 = vmatmul.mubr.f32.gmra.mrb[0].mxu0 %v69
    %v152 = vpop.f32.mrb[0].mxu0
    %v153 = vadd.f32 %v52, %v152
    %v154 = vpop.f32.mrb[0].mxu0
    %155 = vmatprep.mubr.f32.mxu0 0.0
    %156 = vmatmul.mubr.f32.gmra.mrb[0].mxu0 %v72
    %v157 = vpop.f32.mrb[0].mxu0
    %v158 = vadd.f32 %v57, %v157
    %v159 = vpop.f32.mrb[0].mxu0
    %160 = vmatprep.mubr.f32.mxu0 0.0
    %161 = vmatmul.mubr.f32.gmra.mrb[0].mxu0 %v75
    %v162 = vpop.f32.mrb[0].mxu0
    %v163 = vadd.f32 %v62, %v162
    %v164 = vpop.f32.mrb[0].mxu0
    %165 = vdwg.mxu0
    %v166 = vmax.f32 %v148, 0.0
    %v167 = vmax.f32 %v153, 0.0
    %v168 = vmax.f32 %v158, 0.0
    %v169 = vmax.f32 %v163, 0.0
    %v170 = vld [vmem:[%s3] sm:$0xff]
    %v171 = vld [vmem:[%s3 + $0x8] sm:$0xff]
    %v172 = vld [vmem:[%s3 + $0x10] sm:$0xff]
    %v173 = vld [vmem:[%s3 + $0x18] sm:$0xff]
    %v174 = vld [vmem:[%s4] sm:$0xff]
    %v175 = vld [vmem:[%s4 + $0x8] sm:$0xff]
    %v176 = vld [vmem:[%s4 + $0x10] sm:$0xff]
    %v177 = vld [vmem:[%s4 + $0x18] sm:$0xff]
    %179 = vset.pattern.permute.xlu0 0
    %180 = vperm.xlu0 %179, %v174
    %v181 = vpop.permute.xlu0 %180
    %184 = vset.pattern.permute.xlu0 0
    %185 = vperm.xlu0 %184, %v175
    %v186 = vpop.permute.xlu0 %185
    %189 = vset.pattern.permute.xlu0 0
    %190 = vperm.xlu0 %189, %v176
    %v191 = vpop.permute.xlu0 %190
    %194 = vset.pattern.permute.xlu0 0
    %195 = vperm.xlu0 %194, %v177
    %v196 = vpop.permute.xlu0 %195
    %vm198 = vcmask 261120
    %v200 = vsel %vm198, %v170, 0
    %v203 = vsel %vm198, %v171, 0
    %v206 = vsel %vm198, %v172, 0
    %v209 = vsel %vm198, %v173, 0
    %211 = vmatprep.subr.mxu0 0.0
    %212 = vmatpush1.msra.mxu0 %v166
    %213 = vmatprep.subr.mxu0 0.0
    %214 = vmatpush1.msra.mxu0 %v167
    %215 = vmatprep.subr.mxu0 0.0
    %216 = vmatpush1.msra.mxu0 %v168
    %217 = vmatprep.subr.mxu0 0.0
    %218 = vmatpush1.msra.mxu0 %v169
    %219 = vmatprep.subr.mxu0 0.0
    %220 = vmatpush1.msra.mxu0 0.0
    %221 = vmatprep.subr.mxu0 0.0
    %222 = vmatpush1.msra.mxu0 0.0
    %223 = vmatprep.subr.mxu0 0.0
    %224 = vmatpush1.msra.mxu0 0.0
    %225 = vmatprep.subr.mxu0 0.0
    %226 = vmatpush1.msra.mxu0 0.0
    %227 = vmatprep.subr.mxu0 0.0
    %228 = vmatpush1.msra.mxu0 0.0
    %229 = vmatprep.subr.mxu0 0.0
    %230 = vmatpush1.msra.mxu0 0.0
    %231 = vmatprep.subr.mxu0 0.0
    %232 = vmatpush1.msra.mxu0 0.0
    %233 = vmatprep.subr.mxu0 0.0
    %234 = vmatpush1.msra.mxu0 0.0
    %235 = vmatprep.subr.mxu0 0.0
    %236 = vmatpush1.msra.mxu0 0.0
    %237 = vmatprep.subr.mxu0 0.0
    %238 = vmatpush1.msra.mxu0 0.0
    %239 = vmatprep.subr.mxu0 0.0
    %240 = vmatpush1.msra.mxu0 0.0
    %241 = vmatprep.subr.mxu0 0.0
    %242 = vmatpush1.msra.mxu0 0.0
    %243 = vmatprep.subr.mxu0 0.0
    %244 = vmatpush1.msra.mxu0 0.0
    %245 = vmatprep.subr.mxu0 0.0
    %246 = vmatpush1.msra.mxu0 0.0
    %247 = vmatprep.subr.mxu0 0.0
    %248 = vmatpush1.msra.mxu0 0.0
    %249 = vmatprep.subr.mxu0 0.0
    %250 = vmatpush1.msra.mxu0 0.0
    %251 = vmatprep.subr.mxu0 0.0
    %252 = vmatpush1.msra.mxu0 0.0
    %253 = vmatprep.subr.mxu0 0.0
    %254 = vmatpush1.msra.mxu0 0.0
    %255 = vmatprep.subr.mxu0 0.0
    %256 = vmatpush1.msra.mxu0 0.0
    %257 = vmatprep.subr.mxu0 0.0
    %258 = vmatpush1.msra.mxu0 0.0
    %259 = vmatprep.subr.mxu0 0.0
    %260 = vmatpush1.msra.mxu0 0.0
    %261 = vmatprep.subr.mxu0 0.0
    %262 = vmatpush1.msra.mxu0 0.0
    %263 = vmatprep.subr.mxu0 0.0
    %264 = vmatpush1.msra.mxu0 0.0
    %265 = vmatprep.subr.mxu0 0.0
    %266 = vmatpush1.msra.mxu0 0.0
    %267 = vmatprep.subr.mxu0 0.0
    %268 = vmatpush1.msra.mxu0 0.0
    %269 = vmatprep.subr.mxu0 0.0
    %270 = vmatpush1.msra.mxu0 0.0
    %271 = vmatprep.subr.mxu0 0.0
    %272 = vmatpush1.msra.mxu0 0.0
    %273 = vmatprep.subr.mxu0 0.0
    %274 = vmatpush1.msra.mxu0 0.0
    %275 = vmatprep.mubr.f32.mxu0 0.0
    %276 = vmatmul.mubr.f32.gmra.mrb[0].mxu0 %v200
    %v277 = vpop.f32.mrb[0].mxu0
    %v278 = vadd.f32 %v181, %v277
    %v279 = vpop.f32.mrb[0].mxu0
    %280 = vmatprep.mubr.f32.mxu0 0.0
    %281 = vmatmul.mubr.f32.gmra.mrb[0].mxu0 %v203
    %v282 = vpop.f32.mrb[0].mxu0
    %v283 = vadd.f32 %v186, %v282
    %v284 = vpop.f32.mrb[0].mxu0
    %285 = vmatprep.mubr.f32.mxu0 0.0
    %286 = vmatmul.mubr.f32.gmra.mrb[0].mxu0 %v206
    %v287 = vpop.f32.mrb[0].mxu0
    %v288 = vadd.f32 %v191, %v287
    %v289 = vpop.f32.mrb[0].mxu0
    %290 = vmatprep.mubr.f32.mxu0 0.0
    %291 = vmatmul.mubr.f32.gmra.mrb[0].mxu0 %v209
    %v292 = vpop.f32.mrb[0].mxu0
    %v293 = vadd.f32 %v196, %v292
    %v294 = vpop.f32.mrb[0].mxu0
    %295 = vdwg.mxu0
    %v296 = vmax.f32 %v278, 0.0
    %v297 = vmax.f32 %v283, 0.0
    %v298 = vmax.f32 %v288, 0.0
    %v299 = vmax.f32 %v293, 0.0
    %v300 = vld [vmem:[%s5] sm:$0xff]
    %v301 = vld [vmem:[%s5 + $0x8] sm:$0xff]
    %v302 = vld [vmem:[%s5 + $0x10] sm:$0xff]
    %v303 = vld [vmem:[%s5 + $0x18] sm:$0xff]
    %v304 = vld [vmem:[%s6] sm:$0xff]
    %v305 = vld [vmem:[%s6 + $0x8] sm:$0xff]
    %v306 = vld [vmem:[%s6 + $0x10] sm:$0xff]
    %v307 = vld [vmem:[%s6 + $0x18] sm:$0xff]
    %309 = vset.pattern.permute.xlu0 0
    %310 = vperm.xlu0 %309, %v304
    %v311 = vpop.permute.xlu0 %310
    %314 = vset.pattern.permute.xlu0 0
    %315 = vperm.xlu0 %314, %v305
    %v316 = vpop.permute.xlu0 %315
    %319 = vset.pattern.permute.xlu0 0
    %320 = vperm.xlu0 %319, %v306
    %v321 = vpop.permute.xlu0 %320
    %324 = vset.pattern.permute.xlu0 0
    %325 = vperm.xlu0 %324, %v307
    %v326 = vpop.permute.xlu0 %325
    %v329 = vsel %vm198, %v300, 0
    %v332 = vsel %vm198, %v301, 0
    %v335 = vsel %vm198, %v302, 0
    %v338 = vsel %vm198, %v303, 0
    %340 = vmatprep.subr.mxu0 0.0
    %341 = vmatpush1.msra.mxu0 %v296
    %342 = vmatprep.subr.mxu0 0.0
    %343 = vmatpush1.msra.mxu0 %v297
    %344 = vmatprep.subr.mxu0 0.0
    %345 = vmatpush1.msra.mxu0 %v298
    %346 = vmatprep.subr.mxu0 0.0
    %347 = vmatpush1.msra.mxu0 %v299
    %348 = vmatprep.subr.mxu0 0.0
    %349 = vmatpush1.msra.mxu0 0.0
    %350 = vmatprep.subr.mxu0 0.0
    %351 = vmatpush1.msra.mxu0 0.0
    %352 = vmatprep.subr.mxu0 0.0
    %353 = vmatpush1.msra.mxu0 0.0
    %354 = vmatprep.subr.mxu0 0.0
    %355 = vmatpush1.msra.mxu0 0.0
    %356 = vmatprep.subr.mxu0 0.0
    %357 = vmatpush1.msra.mxu0 0.0
    %358 = vmatprep.subr.mxu0 0.0
    %359 = vmatpush1.msra.mxu0 0.0
    %360 = vmatprep.subr.mxu0 0.0
    %361 = vmatpush1.msra.mxu0 0.0
    %362 = vmatprep.subr.mxu0 0.0
    %363 = vmatpush1.msra.mxu0 0.0
    %364 = vmatprep.subr.mxu0 0.0
    %365 = vmatpush1.msra.mxu0 0.0
    %366 = vmatprep.subr.mxu0 0.0
    %367 = vmatpush1.msra.mxu0 0.0
    %368 = vmatprep.subr.mxu0 0.0
    %369 = vmatpush1.msra.mxu0 0.0
    %370 = vmatprep.subr.mxu0 0.0
    %371 = vmatpush1.msra.mxu0 0.0
    %372 = vmatprep.subr.mxu0 0.0
    %373 = vmatpush1.msra.mxu0 0.0
    %374 = vmatprep.subr.mxu0 0.0
    %375 = vmatpush1.msra.mxu0 0.0
    %376 = vmatprep.subr.mxu0 0.0
    %377 = vmatpush1.msra.mxu0 0.0
    %378 = vmatprep.subr.mxu0 0.0
    %379 = vmatpush1.msra.mxu0 0.0
    %380 = vmatprep.subr.mxu0 0.0
    %381 = vmatpush1.msra.mxu0 0.0
    %382 = vmatprep.subr.mxu0 0.0
    %383 = vmatpush1.msra.mxu0 0.0
    %384 = vmatprep.subr.mxu0 0.0
    %385 = vmatpush1.msra.mxu0 0.0
    %386 = vmatprep.subr.mxu0 0.0
    %387 = vmatpush1.msra.mxu0 0.0
    %388 = vmatprep.subr.mxu0 0.0
    %389 = vmatpush1.msra.mxu0 0.0
    %390 = vmatprep.subr.mxu0 0.0
    %391 = vmatpush1.msra.mxu0 0.0
    %392 = vmatprep.subr.mxu0 0.0
    %393 = vmatpush1.msra.mxu0 0.0
    %394 = vmatprep.subr.mxu0 0.0
    %395 = vmatpush1.msra.mxu0 0.0
    %396 = vmatprep.subr.mxu0 0.0
    %397 = vmatpush1.msra.mxu0 0.0
    %398 = vmatprep.subr.mxu0 0.0
    %399 = vmatpush1.msra.mxu0 0.0
    %400 = vmatprep.subr.mxu0 0.0
    %401 = vmatpush1.msra.mxu0 0.0
    %402 = vmatprep.subr.mxu0 0.0
    %403 = vmatpush1.msra.mxu0 0.0
    %404 = vmatprep.mubr.f32.mxu0 0.0
    %405 = vmatmul.mubr.f32.gmra.mrb[0].mxu0 %v329
    %v406 = vpop.f32.mrb[0].mxu0
    %v407 = vadd.f32 %v311, %v406
    %v408 = vpop.f32.mrb[0].mxu0
    %409 = vmatprep.mubr.f32.mxu0 0.0
    %410 = vmatmul.mubr.f32.gmra.mrb[0].mxu0 %v332
    %v411 = vpop.f32.mrb[0].mxu0
    %v412 = vadd.f32 %v316, %v411
    %v413 = vpop.f32.mrb[0].mxu0
    %414 = vmatprep.mubr.f32.mxu0 0.0
    %415 = vmatmul.mubr.f32.gmra.mrb[0].mxu0 %v335
    %v416 = vpop.f32.mrb[0].mxu0
    %v417 = vadd.f32 %v321, %v416
    %v418 = vpop.f32.mrb[0].mxu0
    %419 = vmatprep.mubr.f32.mxu0 0.0
    %420 = vmatmul.mubr.f32.gmra.mrb[0].mxu0 %v338
    %v421 = vpop.f32.mrb[0].mxu0
    %v422 = vadd.f32 %v326, %v421
    %v423 = vpop.f32.mrb[0].mxu0
    %424 = vdwg.mxu0
    %v425 = vmax.f32 %v407, 0.0
    %v426 = vmax.f32 %v412, 0.0
    %v427 = vmax.f32 %v417, 0.0
    %v428 = vmax.f32 %v422, 0.0
    %v429 = vld [vmem:[%s7] sm:$0xff]
    %v430 = vld [vmem:[%s7 + $0x8] sm:$0xff]
    %v431 = vld [vmem:[%s7 + $0x10] sm:$0xff]
    %v432 = vld [vmem:[%s7 + $0x18] sm:$0xff]
    %434 = vset.pattern.permute.xlu0 0
    %435 = vperm.xlu0 %434, %v429
    %v436 = vpop.permute.xlu0 %435
    %439 = vset.pattern.permute.xlu0 0
    %440 = vperm.xlu0 %439, %v430
    %v441 = vpop.permute.xlu0 %440
    %444 = vset.pattern.permute.xlu0 0
    %445 = vperm.xlu0 %444, %v431
    %v446 = vpop.permute.xlu0 %445
    %449 = vset.pattern.permute.xlu0 0
    %450 = vperm.xlu0 %449, %v432
    %v451 = vpop.permute.xlu0 %450
    %v453 = vmul.f32 %v436, %v425
    %v454 = vmul.f32 %v441, %v426
    %v455 = vmul.f32 %v446, %v427
    %v456 = vmul.f32 %v451, %v428
    %v457 = vadd.f32 %v453, %v454
    %v458 = vadd.f32 %v457, %v455
    %v459 = vadd.f32 %v458, %v456
    %v460 = vrot.slane %v459, 4
    %v461 = vadd.f32 %v459, %v460
    %v462 = vrot.slane %v461, 2
    %v463 = vadd.f32 %v461, %v462
    %v464 = vrot.slane %v463, 1
    %v465 = vadd.f32 %v463, %v464
    %v466 = vld [vmem:[#allocation2] sm:$0x1]
    %468 = vset.pattern.permute.xlu0 0
    %469 = vperm.xlu0 %468, %v466
    %v470 = vpop.permute.xlu0 %469
    %v472 = vlaneseq
    %v473 = vshrl.u32 %v472, 7
    %v474 = vsub.s32 0, %v473
    %v475 = vrot.slane %v470, %v474
    %v476 = vadd.f32 %v465, %v475
    %v477 = vsub.f32 0.0, %v476
    %v478 = vmul.f32 %v477, 1.442695
    %v479 = vpow.pop %v478
    %v480 = vadd.f32 %v479, 1.0
    %v481 = vrcp.pop %v480
    %482 = vst [vmem:[#allocation3] sm:$0x1] %v481
    // Predicated region
    $region38: #{tpu_custom_call.1} parent=1 // pred_check
      _
    $region39: #{tpu_custom_call.1} parent=1 // pred_check_branch
      %484 = sbr.rel (0) target = $region41
    $region40: #{tpu_custom_call.1} parent=1 // pred_region
      %s486 = ssub.s32 16, 16
      %487 = vsyncadd [#allocation4], %s486
      %s489 = sshll.u32 [#allocation3], 4
      %s490 = int_to_ptr.vmem [resolvable:$true] %s489
      %492 = dma.vmem_to_hbm [thread:$0]  %s490, 16, %s9, [#allocation4]
    $region41: #{tpu_custom_call.1} parent=1 // pred_fallthru
      _
    // Predicated region
    $region42: #{tpu_custom_call.1} parent=1 // pred_check
      _
    $region43: #{tpu_custom_call.1} parent=1 // pred_check_branch
      %494 = sbr.rel (0) target = $region45
    $region44: #{tpu_custom_call.1} parent=1 // pred_region
      %495 = dma.done [#allocation4], 16
    $region45: #{tpu_custom_call.1} parent=1 // pred_fallthru
      _
    %496 = vsyncpa [#allocation4], 1

// kernel: tpu_custom_call.1
$region0: #{tpu_custom_call.1}
  #allocation0 [shape = 'u32[]', space=smem, size = 0x4, offset = 0x4, fixed_abs, tag = 'smem constant byte address 0x4 - core index']
  #allocation1 [shape = 'u32[144,128]{1,0:T(1,128)}', space=vmem, size = 0x12000, scoped, tag = 'internal scratch']
  #allocation2 [shape = 'f32[1,1]{1,0:T(1,128)S(1)}', space=vmem, size = 0x200, scoped, tag = 'scoped memory for tpu_custom_call.1']
  %s0 = inlined_call_operand.vmem [shape: f32[7,128], index: 0, kind: input, shape index: {}]
  %s1 = inlined_call_operand.vmem [shape: f32[32,7], index: 1, kind: input, shape index: {}]
  %s2 = inlined_call_operand.vmem [shape: f32[32,1], index: 2, kind: input, shape index: {}]
  %s3 = inlined_call_operand.vmem [shape: f32[32,32], index: 3, kind: input, shape index: {}]
  %s4 = inlined_call_operand.vmem [shape: f32[32,1], index: 4, kind: input, shape index: {}]
  %s5 = inlined_call_operand.vmem [shape: f32[32,32], index: 5, kind: input, shape index: {}]
  %s6 = inlined_call_operand.vmem [shape: f32[32,1], index: 6, kind: input, shape index: {}]
  %s7 = inlined_call_operand.vmem [shape: f32[32,1], index: 7, kind: input, shape index: {}]
  %s8 = inlined_call_operand.<no memory space> [shape: f32[1,1], index: 8, kind: input, shape index: {}]
  %s9 = inlined_call_operand.hbm [shape: f32[1,128], index: 9, kind: output, shape index: {}]
  %s10 = sld [smem:[#allocation0]]
  $region46: #{tpu_custom_call.1} parent=0
    _
  %s12 = ssub.s32 1, %s10
  %s13 = scalar_select 0, %s12, %s10
  %v14 = vstv %s8
  %15 = vst [vmem:[#allocation2] sm:$0x1] %v14
  $region1: #{tpu_custom_call.1} parent=0
    #allocation3 [shape = 'u8[512]{0}', space=vmem, size = 0x400, scoped, tag = 'output window, operand 0, single buffered']
    #allocation4 [shape = 's32[1]{0}', space=sflag, size = 0x4, scoped, tag = 'scoped memory for tpu_custom_call.1']
    %16 = vsyncpa [#allocation4], 0
    // Predicated region
    $region2: #{tpu_custom_call.1} parent=1 // pred_check
      _
    $region3: #{tpu_custom_call.1} parent=1 // pred_check_branch
      %18 = sbr.rel (0) target = $region5
    $region4: #{tpu_custom_call.1} parent=1 // pred_region
      _
    $region5: #{tpu_custom_call.1} parent=1 // pred_fallthru
      _
    // Predicated region
    $region6: #{tpu_custom_call.1} parent=1 // pred_check
      _
    $region7: #{tpu_custom_call.1} parent=1 // pred_check_branch
      %20 = sbr.rel (0) target = $region9
    $region8: #{tpu_custom_call.1} parent=1 // pred_region
      _
    $region9: #{tpu_custom_call.1} parent=1 // pred_fallthru
      _
    // Predicated region
    $region10: #{tpu_custom_call.1} parent=1 // pred_check
      _
    $region11: #{tpu_custom_call.1} parent=1 // pred_check_branch
      %22 = sbr.rel (0) target = $region13
    $region12: #{tpu_custom_call.1} parent=1 // pred_region
      _
    $region13: #{tpu_custom_call.1} parent=1 // pred_fallthru
      _
    // Predicated region
    $region14: #{tpu_custom_call.1} parent=1 // pred_check
      _
    $region15: #{tpu_custom_call.1} parent=1 // pred_check_branch
      %24 = sbr.rel (0) target = $region17
    $region16: #{tpu_custom_call.1} parent=1 // pred_region
      _
    $region17: #{tpu_custom_call.1} parent=1 // pred_fallthru
      _
    // Predicated region
    $region18: #{tpu_custom_call.1} parent=1 // pred_check
      _
    $region19: #{tpu_custom_call.1} parent=1 // pred_check_branch
      %26 = sbr.rel (0) target = $region21
    $region20: #{tpu_custom_call.1} parent=1 // pred_region
      _
    $region21: #{tpu_custom_call.1} parent=1 // pred_fallthru
      _
    // Predicated region
    $region22: #{tpu_custom_call.1} parent=1 // pred_check
      _
    $region23: #{tpu_custom_call.1} parent=1 // pred_check_branch
      %28 = sbr.rel (0) target = $region25
    $region24: #{tpu_custom_call.1} parent=1 // pred_region
      _
    $region25: #{tpu_custom_call.1} parent=1 // pred_fallthru
      _
    // Predicated region
    $region26: #{tpu_custom_call.1} parent=1 // pred_check
      _
    $region27: #{tpu_custom_call.1} parent=1 // pred_check_branch
      %30 = sbr.rel (0) target = $region29
    $region28: #{tpu_custom_call.1} parent=1 // pred_region
      _
    $region29: #{tpu_custom_call.1} parent=1 // pred_fallthru
      _
    // Predicated region
    $region30: #{tpu_custom_call.1} parent=1 // pred_check
      _
    $region31: #{tpu_custom_call.1} parent=1 // pred_check_branch
      %32 = sbr.rel (0) target = $region33
    $region32: #{tpu_custom_call.1} parent=1 // pred_region
      _
    $region33: #{tpu_custom_call.1} parent=1 // pred_fallthru
      _
    // Predicated region
    $region34: #{tpu_custom_call.1} parent=1 // pred_check
      _
    $region35: #{tpu_custom_call.1} parent=1 // pred_check_branch
      %34 = sbr.rel (0) target = $region37
    $region36: #{tpu_custom_call.1} parent=1 // pred_region
      _
    $region37: #{tpu_custom_call.1} parent=1 // pred_fallthru
      _
    %v35 = vld [vmem:[%s1] sm:$0xff]
    %v36 = vld [vmem:[%s1 + $0x8] sm:$0xff]
    %v37 = vld [vmem:[%s1 + $0x10] sm:$0xff]
    %v38 = vld [vmem:[%s1 + $0x18] sm:$0xff]
    %v39 = vld [vmem:[%s0] sm:$0x7f]
    %v40 = vld [vmem:[%s2] sm:$0xff]
    %v41 = vld [vmem:[%s2 + $0x8] sm:$0xff]
    %v42 = vld [vmem:[%s2 + $0x10] sm:$0xff]
    %v43 = vld [vmem:[%s2 + $0x18] sm:$0xff]
    %45 = vset.pattern.permute.xlu0 0
    %46 = vperm.xlu0 %45, %v40
    %v47 = vpop.permute.xlu0 %46
    %50 = vset.pattern.permute.xlu0 0
    %51 = vperm.xlu0 %50, %v41
    %v52 = vpop.permute.xlu0 %51
    %55 = vset.pattern.permute.xlu0 0
    %56 = vperm.xlu0 %55, %v42
    %v57 = vpop.permute.xlu0 %56
    %60 = vset.pattern.permute.xlu0 0
    %61 = vperm.xlu0 %60, %v43
    %v62 = vpop.permute.xlu0 %61
    %vm64 = vcmask 56320
    %v66 = vsel %vm64, %v35, 0
    %v69 = vsel %vm64, %v36, 0
    %v72 = vsel %vm64, %v37, 0
    %v75 = vsel %vm64, %v38, 0
    %vm77 = vcmask 1046528
    %v79 = vsel %vm77, %v39, 0
    %81 = vmatprep.subr.mxu0 0.0
    %82 = vmatpush1.msra.mxu0 %v79
    %83 = vmatprep.subr.mxu0 0.0
    %84 = vmatpush1.msra.mxu0 0.0
    %85 = vmatprep.subr.mxu0 0.0
    %86 = vmatpush1.msra.mxu0 0.0
    %87 = vmatprep.subr.mxu0 0.0
    %88 = vmatpush1.msra.mxu0 0.0
    %89 = vmatprep.subr.mxu0 0.0
    %90 = vmatpush1.msra.mxu0 0.0
    %91 = vmatprep.subr.mxu0 0.0
    %92 = vmatpush1.msra.mxu0 0.0
    %93 = vmatprep.subr.mxu0 0.0
    %94 = vmatpush1.msra.mxu0 0.0
    %95 = vmatprep.subr.mxu0 0.0
    %96 = vmatpush1.msra.mxu0 0.0
    %97 = vmatprep.subr.mxu0 0.0
    %98 = vmatpush1.msra.mxu0 0.0
    %99 = vmatprep.subr.mxu0 0.0
    %100 = vmatpush1.msra.mxu0 0.0
    %101 = vmatprep.subr.mxu0 0.0
    %102 = vmatpush1.msra.mxu0 0.0
    %103 = vmatprep.subr.mxu0 0.0
    %104 = vmatpush1.msra.mxu0 0.0
    %105 = vmatprep.subr.mxu0 0.0
    %106 = vmatpush1.msra.mxu0 0.0
    %107 = vmatprep.subr.mxu0 0.0
    %108 = vmatpush1.msra.mxu0 0.0
    %109 = vmatprep.subr.mxu0 0.0
    %110 = vmatpush1.msra.mxu0 0.0
    %111 = vmatprep.subr.mxu0 0.0
    %112 = vmatpush1.msra.mxu0 0.0
    %113 = vmatprep.subr.mxu0 0.0
    %114 = vmatpush1.msra.mxu0 0.0
    %115 = vmatprep.subr.mxu0 0.0
    %116 = vmatpush1.msra.mxu0 0.0
    %117 = vmatprep.subr.mxu0 0.0
    %118 = vmatpush1.msra.mxu0 0.0
    %119 = vmatprep.subr.mxu0 0.0
    %120 = vmatpush1.msra.mxu0 0.0
    %121 = vmatprep.subr.mxu0 0.0
    %122 = vmatpush1.msra.mxu0 0.0
    %123 = vmatprep.subr.mxu0 0.0
    %124 = vmatpush1.msra.mxu0 0.0
    %125 = vmatprep.subr.mxu0 0.0
    %126 = vmatpush1.msra.mxu0 0.0
    %127 = vmatprep.subr.mxu0 0.0
    %128 = vmatpush1.msra.mxu0 0.0
    %129 = vmatprep.subr.mxu0 0.0
    %130 = vmatpush1.msra.mxu0 0.0
    %131 = vmatprep.subr.mxu0 0.0
    %132 = vmatpush1.msra.mxu0 0.0
    %133 = vmatprep.subr.mxu0 0.0
    %134 = vmatpush1.msra.mxu0 0.0
    %135 = vmatprep.subr.mxu0 0.0
    %136 = vmatpush1.msra.mxu0 0.0
    %137 = vmatprep.subr.mxu0 0.0
    %138 = vmatpush1.msra.mxu0 0.0
    %139 = vmatprep.subr.mxu0 0.0
    %140 = vmatpush1.msra.mxu0 0.0
    %141 = vmatprep.subr.mxu0 0.0
    %142 = vmatpush1.msra.mxu0 0.0
    %143 = vmatprep.subr.mxu0 0.0
    %144 = vmatpush1.msra.mxu0 0.0
    %145 = vmatprep.mubr.f32.mxu0 0.0
    %146 = vmatmul.mubr.f32.gmra.mrb[0].mxu0 %v66
    %v147 = vpop.f32.mrb[0].mxu0
    %v148 = vadd.f32 %v47, %v147
    %v149 = vpop.f32.mrb[0].mxu0
    %150 = vmatprep.mubr.f32.mxu0 0.0
    %151 = vmatmul.mubr.f32.gmra.mrb[0].mxu0 %v69
    %v152 = vpop.f32.mrb[0].mxu0
    %v153 = vadd.f32 %v52, %v152
    %v154 = vpop.f32.mrb[0].mxu0
    %155 = vmatprep.mubr.f32.mxu0 0.0
    %156 = vmatmul.mubr.f32.gmra.mrb[0].mxu0 %v72
    %v157 = vpop.f32.mrb[0].mxu0
    %v158 = vadd.f32 %v57, %v157
    %v159 = vpop.f32.mrb[0].mxu0
    %160 = vmatprep.mubr.f32.mxu0 0.0
    %161 = vmatmul.mubr.f32.gmra.mrb[0].mxu0 %v75
    %v162 = vpop.f32.mrb[0].mxu0
    %v163 = vadd.f32 %v62, %v162
    %v164 = vpop.f32.mrb[0].mxu0
    %165 = vdwg.mxu0
    %v166 = vmax.f32 %v148, 0.0
    %v167 = vmax.f32 %v153, 0.0
    %v168 = vmax.f32 %v158, 0.0
    %v169 = vmax.f32 %v163, 0.0
    %v170 = vld [vmem:[%s3] sm:$0xff]
    %v171 = vld [vmem:[%s3 + $0x8] sm:$0xff]
    %v172 = vld [vmem:[%s3 + $0x10] sm:$0xff]
    %v173 = vld [vmem:[%s3 + $0x18] sm:$0xff]
    %v174 = vld [vmem:[%s4] sm:$0xff]
    %v175 = vld [vmem:[%s4 + $0x8] sm:$0xff]
    %v176 = vld [vmem:[%s4 + $0x10] sm:$0xff]
    %v177 = vld [vmem:[%s4 + $0x18] sm:$0xff]
    %179 = vset.pattern.permute.xlu0 0
    %180 = vperm.xlu0 %179, %v174
    %v181 = vpop.permute.xlu0 %180
    %184 = vset.pattern.permute.xlu0 0
    %185 = vperm.xlu0 %184, %v175
    %v186 = vpop.permute.xlu0 %185
    %189 = vset.pattern.permute.xlu0 0
    %190 = vperm.xlu0 %189, %v176
    %v191 = vpop.permute.xlu0 %190
    %194 = vset.pattern.permute.xlu0 0
    %195 = vperm.xlu0 %194, %v177
    %v196 = vpop.permute.xlu0 %195
    %vm198 = vcmask 261120
    %v200 = vsel %vm198, %v170, 0
    %v203 = vsel %vm198, %v171, 0
    %v206 = vsel %vm198, %v172, 0
    %v209 = vsel %vm198, %v173, 0
    %211 = vmatprep.subr.mxu0 0.0
    %212 = vmatpush1.msra.mxu0 %v166
    %213 = vmatprep.subr.mxu0 0.0
    %214 = vmatpush1.msra.mxu0 %v167
    %215 = vmatprep.subr.mxu0 0.0
    %216 = vmatpush1.msra.mxu0 %v168
    %217 = vmatprep.subr.mxu0 0.0
    %218 = vmatpush1.msra.mxu0 %v169
    %219 = vmatprep.subr.mxu0 0.0
    %220 = vmatpush1.msra.mxu0 0.0
    %221 = vmatprep.subr.mxu0 0.0
    %222 = vmatpush1.msra.mxu0 0.0
    %223 = vmatprep.subr.mxu0 0.0
    %224 = vmatpush1.msra.mxu0 0.0
    %225 = vmatprep.subr.mxu0 0.0
    %226 = vmatpush1.msra.mxu0 0.0
    %227 = vmatprep.subr.mxu0 0.0
    %228 = vmatpush1.msra.mxu0 0.0
    %229 = vmatprep.subr.mxu0 0.0
    %230 = vmatpush1.msra.mxu0 0.0
    %231 = vmatprep.subr.mxu0 0.0
    %232 = vmatpush1.msra.mxu0 0.0
    %233 = vmatprep.subr.mxu0 0.0
    %234 = vmatpush1.msra.mxu0 0.0
    %235 = vmatprep.subr.mxu0 0.0
    %236 = vmatpush1.msra.mxu0 0.0
    %237 = vmatprep.subr.mxu0 0.0
    %238 = vmatpush1.msra.mxu0 0.0
    %239 = vmatprep.subr.mxu0 0.0
    %240 = vmatpush1.msra.mxu0 0.0
    %241 = vmatprep.subr.mxu0 0.0
    %242 = vmatpush1.msra.mxu0 0.0
    %243 = vmatprep.subr.mxu0 0.0
    %244 = vmatpush1.msra.mxu0 0.0
    %245 = vmatprep.subr.mxu0 0.0
    %246 = vmatpush1.msra.mxu0 0.0
    %247 = vmatprep.subr.mxu0 0.0
    %248 = vmatpush1.msra.mxu0 0.0
    %249 = vmatprep.subr.mxu0 0.0
    %250 = vmatpush1.msra.mxu0 0.0
    %251 = vmatprep.subr.mxu0 0.0
    %252 = vmatpush1.msra.mxu0 0.0
    %253 = vmatprep.subr.mxu0 0.0
    %254 = vmatpush1.msra.mxu0 0.0
    %255 = vmatprep.subr.mxu0 0.0
    %256 = vmatpush1.msra.mxu0 0.0
    %257 = vmatprep.subr.mxu0 0.0
    %258 = vmatpush1.msra.mxu0 0.0
    %259 = vmatprep.subr.mxu0 0.0
    %260 = vmatpush1.msra.mxu0 0.0
    %261 = vmatprep.subr.mxu0 0.0
    %262 = vmatpush1.msra.mxu0 0.0
    %263 = vmatprep.subr.mxu0 0.0
    %264 = vmatpush1.msra.mxu0 0.0
    %265 = vmatprep.subr.mxu0 0.0
    %266 = vmatpush1.msra.mxu0 0.0
    %267 = vmatprep.subr.mxu0 0.0
    %268 = vmatpush1.msra.mxu0 0.0
    %269 = vmatprep.subr.mxu0 0.0
    %270 = vmatpush1.msra.mxu0 0.0
    %271 = vmatprep.subr.mxu0 0.0
    %272 = vmatpush1.msra.mxu0 0.0
    %273 = vmatprep.subr.mxu0 0.0
    %274 = vmatpush1.msra.mxu0 0.0
    %275 = vmatprep.mubr.f32.mxu0 0.0
    %276 = vmatmul.mubr.f32.gmra.mrb[0].mxu0 %v200
    %v277 = vpop.f32.mrb[0].mxu0
    %v278 = vadd.f32 %v181, %v277
    %v279 = vpop.f32.mrb[0].mxu0
    %280 = vmatprep.mubr.f32.mxu0 0.0
    %281 = vmatmul.mubr.f32.gmra.mrb[0].mxu0 %v203
    %v282 = vpop.f32.mrb[0].mxu0
    %v283 = vadd.f32 %v186, %v282
    %v284 = vpop.f32.mrb[0].mxu0
    %285 = vmatprep.mubr.f32.mxu0 0.0
    %286 = vmatmul.mubr.f32.gmra.mrb[0].mxu0 %v206
    %v287 = vpop.f32.mrb[0].mxu0
    %v288 = vadd.f32 %v191, %v287
    %v289 = vpop.f32.mrb[0].mxu0
    %290 = vmatprep.mubr.f32.mxu0 0.0
    %291 = vmatmul.mubr.f32.gmra.mrb[0].mxu0 %v209
    %v292 = vpop.f32.mrb[0].mxu0
    %v293 = vadd.f32 %v196, %v292
    %v294 = vpop.f32.mrb[0].mxu0
    %295 = vdwg.mxu0
    %v296 = vmax.f32 %v278, 0.0
    %v297 = vmax.f32 %v283, 0.0
    %v298 = vmax.f32 %v288, 0.0
    %v299 = vmax.f32 %v293, 0.0
    %v300 = vld [vmem:[%s5] sm:$0xff]
    %v301 = vld [vmem:[%s5 + $0x8] sm:$0xff]
    %v302 = vld [vmem:[%s5 + $0x10] sm:$0xff]
    %v303 = vld [vmem:[%s5 + $0x18] sm:$0xff]
    %v304 = vld [vmem:[%s6] sm:$0xff]
    %v305 = vld [vmem:[%s6 + $0x8] sm:$0xff]
    %v306 = vld [vmem:[%s6 + $0x10] sm:$0xff]
    %v307 = vld [vmem:[%s6 + $0x18] sm:$0xff]
    %309 = vset.pattern.permute.xlu0 0
    %310 = vperm.xlu0 %309, %v304
    %v311 = vpop.permute.xlu0 %310
    %314 = vset.pattern.permute.xlu0 0
    %315 = vperm.xlu0 %314, %v305
    %v316 = vpop.permute.xlu0 %315
    %319 = vset.pattern.permute.xlu0 0
    %320 = vperm.xlu0 %319, %v306
    %v321 = vpop.permute.xlu0 %320
    %324 = vset.pattern.permute.xlu0 0
    %325 = vperm.xlu0 %324, %v307
    %v326 = vpop.permute.xlu0 %325
    %v329 = vsel %vm198, %v300, 0
    %v332 = vsel %vm198, %v301, 0
    %v335 = vsel %vm198, %v302, 0
    %v338 = vsel %vm198, %v303, 0
    %340 = vmatprep.subr.mxu0 0.0
    %341 = vmatpush1.msra.mxu0 %v296
    %342 = vmatprep.subr.mxu0 0.0
    %343 = vmatpush1.msra.mxu0 %v297
    %344 = vmatprep.subr.mxu0 0.0
    %345 = vmatpush1.msra.mxu0 %v298
    %346 = vmatprep.subr.mxu0 0.0
    %347 = vmatpush1.msra.mxu0 %v299
    %348 = vmatprep.subr.mxu0 0.0
    %349 = vmatpush1.msra.mxu0 0.0
    %350 = vmatprep.subr.mxu0 0.0
    %351 = vmatpush1.msra.mxu0 0.0
    %352 = vmatprep.subr.mxu0 0.0
    %353 = vmatpush1.msra.mxu0 0.0
    %354 = vmatprep.subr.mxu0 0.0
    %355 = vmatpush1.msra.mxu0 0.0
    %356 = vmatprep.subr.mxu0 0.0
    %357 = vmatpush1.msra.mxu0 0.0
    %358 = vmatprep.subr.mxu0 0.0
    %359 = vmatpush1.msra.mxu0 0.0
    %360 = vmatprep.subr.mxu0 0.0
    %361 = vmatpush1.msra.mxu0 0.0
    %362 = vmatprep.subr.mxu0 0.0
    %363 = vmatpush1.msra.mxu0 0.0
    %364 = vmatprep.subr.mxu0 0.0
    %365 = vmatpush1.msra.mxu0 0.0
    %366 = vmatprep.subr.mxu0 0.0
    %367 = vmatpush1.msra.mxu0 0.0
    %368 = vmatprep.subr.mxu0 0.0
    %369 = vmatpush1.msra.mxu0 0.0
    %370 = vmatprep.subr.mxu0 0.0
    %371 = vmatpush1.msra.mxu0 0.0
    %372 = vmatprep.subr.mxu0 0.0
    %373 = vmatpush1.msra.mxu0 0.0
    %374 = vmatprep.subr.mxu0 0.0
    %375 = vmatpush1.msra.mxu0 0.0
    %376 = vmatprep.subr.mxu0 0.0
    %377 = vmatpush1.msra.mxu0 0.0
    %378 = vmatprep.subr.mxu0 0.0
    %379 = vmatpush1.msra.mxu0 0.0
    %380 = vmatprep.subr.mxu0 0.0
    %381 = vmatpush1.msra.mxu0 0.0
    %382 = vmatprep.subr.mxu0 0.0
    %383 = vmatpush1.msra.mxu0 0.0
    %384 = vmatprep.subr.mxu0 0.0
    %385 = vmatpush1.msra.mxu0 0.0
    %386 = vmatprep.subr.mxu0 0.0
    %387 = vmatpush1.msra.mxu0 0.0
    %388 = vmatprep.subr.mxu0 0.0
    %389 = vmatpush1.msra.mxu0 0.0
    %390 = vmatprep.subr.mxu0 0.0
    %391 = vmatpush1.msra.mxu0 0.0
    %392 = vmatprep.subr.mxu0 0.0
    %393 = vmatpush1.msra.mxu0 0.0
    %394 = vmatprep.subr.mxu0 0.0
    %395 = vmatpush1.msra.mxu0 0.0
    %396 = vmatprep.subr.mxu0 0.0
    %397 = vmatpush1.msra.mxu0 0.0
    %398 = vmatprep.subr.mxu0 0.0
    %399 = vmatpush1.msra.mxu0 0.0
    %400 = vmatprep.subr.mxu0 0.0
    %401 = vmatpush1.msra.mxu0 0.0
    %402 = vmatprep.subr.mxu0 0.0
    %403 = vmatpush1.msra.mxu0 0.0
    %404 = vmatprep.mubr.f32.mxu0 0.0
    %405 = vmatmul.mubr.f32.gmra.mrb[0].mxu0 %v329
    %v406 = vpop.f32.mrb[0].mxu0
    %v407 = vadd.f32 %v311, %v406
    %v408 = vpop.f32.mrb[0].mxu0
    %409 = vmatprep.mubr.f32.mxu0 0.0
    %410 = vmatmul.mubr.f32.gmra.mrb[0].mxu0 %v332
    %v411 = vpop.f32.mrb[0].mxu0
    %v412 = vadd.f32 %v316, %v411
    %v413 = vpop.f32.mrb[0].mxu0
    %414 = vmatprep.mubr.f32.mxu0 0.0
    %415 = vmatmul.mubr.f32.gmra.mrb[0].mxu0 %v335
    %v416 = vpop.f32.mrb[0].mxu0
    %v417 = vadd.f32 %v321, %v416
    %v418 = vpop.f32.mrb[0].mxu0
    %419 = vmatprep.mubr.f32.mxu0 0.0
    %420 = vmatmul.mubr.f32.gmra.mrb[0].mxu0 %v338
    %v421 = vpop.f32.mrb[0].mxu0
    %v422 = vadd.f32 %v326, %v421
    %v423 = vpop.f32.mrb[0].mxu0
    %424 = vdwg.mxu0
    %v425 = vmax.f32 %v407, 0.0
    %v426 = vmax.f32 %v412, 0.0
    %v427 = vmax.f32 %v417, 0.0
    %v428 = vmax.f32 %v422, 0.0
    %v429 = vld [vmem:[%s7] sm:$0xff]
    %v430 = vld [vmem:[%s7 + $0x8] sm:$0xff]
    %v431 = vld [vmem:[%s7 + $0x10] sm:$0xff]
    %v432 = vld [vmem:[%s7 + $0x18] sm:$0xff]
    %434 = vset.pattern.permute.xlu0 0
    %435 = vperm.xlu0 %434, %v429
    %v436 = vpop.permute.xlu0 %435
    %439 = vset.pattern.permute.xlu0 0
    %440 = vperm.xlu0 %439, %v430
    %v441 = vpop.permute.xlu0 %440
    %444 = vset.pattern.permute.xlu0 0
    %445 = vperm.xlu0 %444, %v431
    %v446 = vpop.permute.xlu0 %445
    %449 = vset.pattern.permute.xlu0 0
    %450 = vperm.xlu0 %449, %v432
    %v451 = vpop.permute.xlu0 %450
    %v453 = vmul.f32 %v436, %v425
    %v454 = vmul.f32 %v441, %v426
    %v455 = vmul.f32 %v446, %v427
    %v456 = vmul.f32 %v451, %v428
    %v457 = vadd.f32 %v453, %v454
    %v458 = vadd.f32 %v457, %v455
    %v459 = vadd.f32 %v458, %v456
    %v460 = vrot.slane %v459, 4
    %v461 = vadd.f32 %v459, %v460
    %v462 = vrot.slane %v461, 2
    %v463 = vadd.f32 %v461, %v462
    %v464 = vrot.slane %v463, 1
    %v465 = vadd.f32 %v463, %v464
    %v466 = vld [vmem:[#allocation2] sm:$0x1]
    %468 = vset.pattern.permute.xlu0 0
    %469 = vperm.xlu0 %468, %v466
    %v470 = vpop.permute.xlu0 %469
    %v472 = vlaneseq
    %v473 = vshrl.u32 %v472, 7
    %v474 = vsub.s32 0, %v473
    %v475 = vrot.slane %v470, %v474
    %v476 = vadd.f32 %v465, %v475
    %v477 = vsub.f32 0.0, %v476
    %v478 = vmul.f32 %v477, 1.442695
    %v479 = vpow.pop %v478
    %v480 = vadd.f32 %v479, 1.0
    %v481 = vrcp.pop %v480
    %482 = vst [vmem:[#allocation3] sm:$0x1] %v481
    // Predicated region
    $region38: #{tpu_custom_call.1} parent=1 // pred_check
      _
    $region39: #{tpu_custom_call.1} parent=1 // pred_check_branch
      %484 = sbr.rel (0) target = $region41
    $region40: #{tpu_custom_call.1} parent=1 // pred_region
      %s486 = ssub.s32 16, 16
      %487 = vsyncadd [#allocation4], %s486
      %s489 = sshll.u32 [#allocation3], 4
      %s490 = int_to_ptr.vmem [resolvable:$true] %s489
      %492 = dma.vmem_to_hbm [thread:$0]  %s490, 16, %s9, [#allocation4]
    $region41: #{tpu_custom_call.1} parent=1 // pred_fallthru
      _
    // Predicated region
    $region42: #{tpu_custom_call.1} parent=1 // pred_check
      _
    $region43: #{tpu_custom_call.1} parent=1 // pred_check_branch
      %494 = sbr.rel (0) target = $region45
    $region44: #{tpu_custom_call.1} parent=1 // pred_region
      %495 = dma.done [#allocation4], 16
    $region45: #{tpu_custom_call.1} parent=1 // pred_fallthru
      _
    %496 = vsyncpa [#allocation4], 1

</llo_original>
